<compile_context>
chip_gen: v5e
topology: v5e:2x2
jax: 0.10.0
libtpu: 0.0.40
codegen_flags: <defaults>
</compile_context>

<pallas_src>
import jax
import jax.numpy as jnp
import numpy as np
from jax.experimental import pallas as pl
from jax.experimental.pallas import tpu as pltpu

# ---------------- model sizes (small, consistent with the module) ----------------
VOCAB = 128      # vocab_size
EMB = 16         # embedding_size
HID = 32         # hidden_size  (4*HID = 128 -> lane-friendly gate matmul)
B = 2            # batch
T = 8            # sequence length


# ---------------- Pallas kernel: LSTM recurrence + fc + cross-entropy ----------------
def lstm_fc_ce_kernel(x_ref, y_ref, wih_ref, whh_ref, b_ref, wfc_ref, bfc_ref,
                      logits_ref, loss_ref):
    # x_ref:      (T*B, E)   time-major flattened embeddings
    # y_ref:      (T*B, 1)   int32 targets (time-major flattened)
    # wih_ref:    (E, 4H)    W_ih^T
    # whh_ref:    (H, 4H)    W_hh^T
    # b_ref:      (1, 4H)    b_ih + b_hh
    # wfc_ref:    (H, V)     W_fc^T
    # bfc_ref:    (1, V)     b_fc
    # logits_ref: (T*B, V)   lane-dense logits slab
    # loss_ref:   (1, 1)     mean cross-entropy
    H = HID

    # Hoisted input projection + bias: one (T*B,E)x(E,4H) matmul, done once.
    gates_x = (jnp.dot(x_ref[...], wih_ref[...], preferred_element_type=jnp.float32)
               + b_ref[...])                                     # (T*B, 4H)

    whh = whh_ref[...]                                           # (H, 4H), load once

    # Serial LSTM recurrence: only h @ W_hh^T per step on the critical path.
    h = jnp.zeros((B, H), jnp.float32)
    c = jnp.zeros((B, H), jnp.float32)
    hs = []
    for t in range(T):                                           # T=8, fully static/unrolled
        gates = (gates_x[t * B:(t + 1) * B, :]
                 + jnp.dot(h, whh, preferred_element_type=jnp.float32))   # (B, 4H)
        # Nonlinearities on the whole vreg, then lane-slice.
        sig = jax.nn.sigmoid(gates)
        th = jnp.tanh(gates)
        i_g = sig[:, 0:H]            # input gate
        f_g = sig[:, H:2 * H]        # forget gate
        g_g = th[:, 2 * H:3 * H]     # cell candidate
        o_g = sig[:, 3 * H:4 * H]    # output gate
        c = f_g * c + i_g * g_g
        h = o_g * jnp.tanh(c)
        hs.append(h)
    h_all = jnp.concatenate(hs, axis=0)                          # (T*B, H), time-major

    # Batched fc: one (T*B,H)x(H,V) matmul; single unmasked (16,128) store.
    logits = (jnp.dot(h_all, wfc_ref[...], preferred_element_type=jnp.float32)
              + bfc_ref[...])                                    # (T*B, V)
    logits_ref[...] = logits.astype(logits_ref.dtype)

    # Cross-entropy (mean over all T*B positions), computed once on the full slab.
    m = jnp.max(logits, axis=-1, keepdims=True)                  # (T*B, 1)
    lse = m + jnp.log(jnp.sum(jnp.exp(logits - m), axis=-1, keepdims=True))   # (T*B, 1)
    col = jax.lax.broadcasted_iota(jnp.int32, logits.shape, 1)   # (T*B, V)
    tgt = jnp.sum(jnp.where(col == y_ref[...], logits, 0.0),
                  axis=-1, keepdims=True)                        # (T*B, 1)
    loss_ref[...] = (jnp.sum(lse - tgt) / jnp.float32(T * B)).reshape(1, 1)


def lstm_model_forward(x_tokens, y_tokens, params):
    """Mirrors LSTMModel.forward: returns (logits (B,T,V), scalar loss)."""
    emb, w_ih, w_hh, b_ih, b_hh, w_fc, b_fc = params

    # glue: embedding lookup (gather) + time-major flattening of inputs and targets.
    # TODO(synk): the embedding gather stays in XLA; a Pallas DMA-gather is not worth it
    # for 16 rows of a 128x16 table.
    x_emb = emb[x_tokens].astype(jnp.float32)                          # (B, T, E)
    x2d = jnp.transpose(x_emb, (1, 0, 2)).reshape(T * B, EMB)          # (T*B, E)
    y2d = jnp.transpose(y_tokens, (1, 0)).reshape(T * B, 1).astype(jnp.int32)  # (T*B, 1)

    wih_t = jnp.transpose(w_ih).astype(jnp.float32)                    # (E, 4H)
    whh_t = jnp.transpose(w_hh).astype(jnp.float32)                    # (H, 4H)
    b_all = (b_ih + b_hh).reshape(1, -1).astype(jnp.float32)           # (1, 4H)
    wfc_t = jnp.transpose(w_fc).astype(jnp.float32)                    # (H, V)
    bfc = b_fc.reshape(1, -1).astype(jnp.float32)                      # (1, V)

    vmem = pl.BlockSpec(memory_space=pltpu.MemorySpace.VMEM)
    logits2d, loss = pl.pallas_call(
        lstm_fc_ce_kernel,
        out_shape=(jax.ShapeDtypeStruct((T * B, VOCAB), jnp.float32),
                   jax.ShapeDtypeStruct((1, 1), jnp.float32)),
        in_specs=[vmem] * 7,
        out_specs=(vmem, vmem),
    )(x2d, y2d, wih_t, whh_t, b_all, wfc_t, bfc)

    logits = jnp.transpose(logits2d.reshape(T, B, VOCAB), (1, 0, 2))   # (B, T, V)
    return logits, loss[0, 0]


# ---------------- pure-JAX reference (sanity check) ----------------
def reference_forward(x_tokens, y_tokens, params):
    emb, w_ih, w_hh, b_ih, b_hh, w_fc, b_fc = params
    x_emb = emb[x_tokens].astype(jnp.float32)      # (B, T, E)
    h = jnp.zeros((B, HID), jnp.float32)
    c = jnp.zeros((B, HID), jnp.float32)
    outs = []
    for t in range(T):
        g = x_emb[:, t] @ w_ih.T + h @ w_hh.T + b_ih + b_hh
        i = jax.nn.sigmoid(g[:, :HID])
        f = jax.nn.sigmoid(g[:, HID:2 * HID])
        gg = jnp.tanh(g[:, 2 * HID:3 * HID])
        o = jax.nn.sigmoid(g[:, 3 * HID:])
        c = f * c + i * gg
        h = o * jnp.tanh(c)
        outs.append(h)
    out = jnp.stack(outs, axis=1)                  # (B, T, H)
    logits = out @ w_fc.T + b_fc                   # (B, T, V)
    logp = jax.nn.log_softmax(logits, axis=-1)
    nll = -jnp.take_along_axis(logp, y_tokens[..., None], axis=-1)[..., 0]
    return logits, jnp.mean(nll)


# ---------------- deterministic parameter init (shapes from __init__) ----------------
def init_params(key):
    ks = jax.random.split(key, 7)
    bound = 1.0 / np.sqrt(HID)
    emb = jax.random.normal(ks[0], (VOCAB, EMB), jnp.float32)                      # nn.Embedding
    w_ih = jax.random.uniform(ks[1], (4 * HID, EMB), jnp.float32, -bound, bound)   # weight_ih_l0
    w_hh = jax.random.uniform(ks[2], (4 * HID, HID), jnp.float32, -bound, bound)   # weight_hh_l0
    b_ih = jax.random.uniform(ks[3], (4 * HID,), jnp.float32, -bound, bound)
    b_hh = jax.random.uniform(ks[4], (4 * HID,), jnp.float32, -bound, bound)
    w_fc = jax.random.uniform(ks[5], (VOCAB, HID), jnp.float32, -bound, bound)     # nn.Linear
    b_fc = jax.random.uniform(ks[6], (VOCAB,), jnp.float32, -bound, bound)
    return (emb, w_ih, w_hh, b_ih, b_hh, w_fc, b_fc)


if __name__ == "__main__":
    key = jax.random.PRNGKey(0)
    k_p, k_x, k_y = jax.random.split(key, 3)
    params = init_params(k_p)
    x = jax.random.randint(k_x, (B, T), 0, VOCAB, dtype=jnp.int32)
    y = jax.random.randint(k_y, (B, T), 0, VOCAB, dtype=jnp.int32)

    logits, loss = jax.jit(lstm_model_forward)(x, y, params)
    jax.block_until_ready((logits, loss))

    ref_logits, ref_loss = reference_forward(x, y, params)
    np.testing.assert_allclose(np.asarray(logits), np.asarray(ref_logits),
                               rtol=5e-3, atol=5e-3)
    np.testing.assert_allclose(float(loss), float(ref_loss), rtol=5e-3, atol=5e-3)

    print("KERNEL_OK")
</pallas_src>

<mosaic_0001>
module attributes {stable_mosaic.version = 11 : i64} {
  func.func @lstm_fc_ce_kernel(%arg0: memref<16x16xf32, #tpu.memory_space<vmem>>, %arg1: memref<16x1xi32, #tpu.memory_space<vmem>>, %arg2: memref<16x128xf32, #tpu.memory_space<vmem>>, %arg3: memref<32x128xf32, #tpu.memory_space<vmem>>, %arg4: memref<1x128xf32, #tpu.memory_space<vmem>>, %arg5: memref<32x128xf32, #tpu.memory_space<vmem>>, %arg6: memref<1x128xf32, #tpu.memory_space<vmem>>, %arg7: memref<16x128xf32, #tpu.memory_space<vmem>>, %arg8: memref<1x1xf32, #tpu.memory_space<vmem>>) attributes {dimension_semantics = [], scalar_prefetch = 0 : i64, scratch_operands = 0 : i64, tpu.core_type = #tpu.core_type<tc>} {
    %c0 = arith.constant 0 : index
    %c0_0 = arith.constant 0 : index
    %0 = vector.load %arg0[%c0, %c0_0] : memref<16x16xf32, #tpu.memory_space<vmem>>, vector<16x16xf32>
    %c0_1 = arith.constant 0 : index
    %c0_2 = arith.constant 0 : index
    %1 = vector.load %arg2[%c0_1, %c0_2] : memref<16x128xf32, #tpu.memory_space<vmem>>, vector<16x128xf32>
    %cst = arith.constant dense<0.000000e+00> : vector<16x128xf32>
    %2 = tpu.matmul %0, %1, %cst {dimension_numbers = #tpu.dot_dimension_numbers<[1], [0], [0], [1], [0, 0, 1, 1], [], []>} : vector<16x16xf32>, vector<16x128xf32>, vector<16x128xf32> -> vector<16x128xf32>
    %c0_3 = arith.constant 0 : index
    %c0_4 = arith.constant 0 : index
    %3 = vector.load %arg4[%c0_3, %c0_4] : memref<1x128xf32, #tpu.memory_space<vmem>>, vector<1x128xf32>
    %4 = vector.broadcast %3 : vector<1x128xf32> to vector<16x128xf32>
    %5 = arith.addf %2, %4 : vector<16x128xf32>
    %c0_5 = arith.constant 0 : index
    %c0_6 = arith.constant 0 : index
    %6 = vector.load %arg3[%c0_5, %c0_6] : memref<32x128xf32, #tpu.memory_space<vmem>>, vector<32x128xf32>
    %cst_7 = arith.constant 0.000000e+00 : f32
    %7 = vector.broadcast %cst_7 : f32 to vector<2x32xf32>
    %cst_8 = arith.constant 0.000000e+00 : f32
    %8 = vector.broadcast %cst_8 : f32 to vector<2x32xf32>
    %9 = vector.extract_strided_slice %5 {offsets = [0, 0], sizes = [2, 128], strides = [1, 1]} : vector<16x128xf32> to vector<2x128xf32>
    %cst_9 = arith.constant dense<0.000000e+00> : vector<2x128xf32>
    %10 = tpu.matmul %7, %6, %cst_9 {dimension_numbers = #tpu.dot_dimension_numbers<[1], [0], [0], [1], [0, 0, 1, 1], [], []>} : vector<2x32xf32>, vector<32x128xf32>, vector<2x128xf32> -> vector<2x128xf32>
    %11 = arith.addf %9, %10 : vector<2x128xf32>
    %12 = arith.negf %11 : vector<2x128xf32>
    %13 = math.exp %12 : vector<2x128xf32>
    %cst_10 = arith.constant 1.000000e+00 : f32
    %14 = vector.broadcast %cst_10 : f32 to vector<2x128xf32>
    %15 = arith.addf %14, %13 : vector<2x128xf32>
    %16 = arith.divf %14, %15 : vector<2x128xf32>
    %17 = math.tanh %11 : vector<2x128xf32>
    %18 = vector.extract_strided_slice %16 {offsets = [0, 0], sizes = [2, 32], strides = [1, 1]} : vector<2x128xf32> to vector<2x32xf32>
    %19 = vector.extract_strided_slice %16 {offsets = [0, 32], sizes = [2, 32], strides = [1, 1]} : vector<2x128xf32> to vector<2x32xf32>
    %20 = vector.extract_strided_slice %17 {offsets = [0, 64], sizes = [2, 32], strides = [1, 1]} : vector<2x128xf32> to vector<2x32xf32>
    %21 = vector.extract_strided_slice %16 {offsets = [0, 96], sizes = [2, 32], strides = [1, 1]} : vector<2x128xf32> to vector<2x32xf32>
    %22 = arith.mulf %19, %8 : vector<2x32xf32>
    %23 = arith.mulf %18, %20 : vector<2x32xf32>
    %24 = arith.addf %22, %23 : vector<2x32xf32>
    %25 = math.tanh %24 : vector<2x32xf32>
    %26 = arith.mulf %21, %25 : vector<2x32xf32>
    %27 = vector.extract_strided_slice %5 {offsets = [2, 0], sizes = [2, 128], strides = [1, 1]} : vector<16x128xf32> to vector<2x128xf32>
    %cst_11 = arith.constant dense<0.000000e+00> : vector<2x128xf32>
    %28 = tpu.matmul %26, %6, %cst_11 {dimension_numbers = #tpu.dot_dimension_numbers<[1], [0], [0], [1], [0, 0, 1, 1], [], []>} : vector<2x32xf32>, vector<32x128xf32>, vector<2x128xf32> -> vector<2x128xf32>
    %29 = arith.addf %27, %28 : vector<2x128xf32>
    %30 = arith.negf %29 : vector<2x128xf32>
    %31 = math.exp %30 : vector<2x128xf32>
    %cst_12 = arith.constant 1.000000e+00 : f32
    %32 = vector.broadcast %cst_12 : f32 to vector<2x128xf32>
    %33 = arith.addf %32, %31 : vector<2x128xf32>
    %34 = arith.divf %32, %33 : vector<2x128xf32>
    %35 = math.tanh %29 : vector<2x128xf32>
    %36 = vector.extract_strided_slice %34 {offsets = [0, 0], sizes = [2, 32], strides = [1, 1]} : vector<2x128xf32> to vector<2x32xf32>
    %37 = vector.extract_strided_slice %34 {offsets = [0, 32], sizes = [2, 32], strides = [1, 1]} : vector<2x128xf32> to vector<2x32xf32>
    %38 = vector.extract_strided_slice %35 {offsets = [0, 64], sizes = [2, 32], strides = [1, 1]} : vector<2x128xf32> to vector<2x32xf32>
    %39 = vector.extract_strided_slice %34 {offsets = [0, 96], sizes = [2, 32], strides = [1, 1]} : vector<2x128xf32> to vector<2x32xf32>
    %40 = arith.mulf %37, %24 : vector<2x32xf32>
    %41 = arith.mulf %36, %38 : vector<2x32xf32>
    %42 = arith.addf %40, %41 : vector<2x32xf32>
    %43 = math.tanh %42 : vector<2x32xf32>
    %44 = arith.mulf %39, %43 : vector<2x32xf32>
    %45 = vector.extract_strided_slice %5 {offsets = [4, 0], sizes = [2, 128], strides = [1, 1]} : vector<16x128xf32> to vector<2x128xf32>
    %cst_13 = arith.constant dense<0.000000e+00> : vector<2x128xf32>
    %46 = tpu.matmul %44, %6, %cst_13 {dimension_numbers = #tpu.dot_dimension_numbers<[1], [0], [0], [1], [0, 0, 1, 1], [], []>} : vector<2x32xf32>, vector<32x128xf32>, vector<2x128xf32> -> vector<2x128xf32>
    %47 = arith.addf %45, %46 : vector<2x128xf32>
    %48 = arith.negf %47 : vector<2x128xf32>
    %49 = math.exp %48 : vector<2x128xf32>
    %cst_14 = arith.constant 1.000000e+00 : f32
    %50 = vector.broadcast %cst_14 : f32 to vector<2x128xf32>
    %51 = arith.addf %50, %49 : vector<2x128xf32>
    %52 = arith.divf %50, %51 : vector<2x128xf32>
    %53 = math.tanh %47 : vector<2x128xf32>
    %54 = vector.extract_strided_slice %52 {offsets = [0, 0], sizes = [2, 32], strides = [1, 1]} : vector<2x128xf32> to vector<2x32xf32>
    %55 = vector.extract_strided_slice %52 {offsets = [0, 32], sizes = [2, 32], strides = [1, 1]} : vector<2x128xf32> to vector<2x32xf32>
    %56 = vector.extract_strided_slice %53 {offsets = [0, 64], sizes = [2, 32], strides = [1, 1]} : vector<2x128xf32> to vector<2x32xf32>
    %57 = vector.extract_strided_slice %52 {offsets = [0, 96], sizes = [2, 32], strides = [1, 1]} : vector<2x128xf32> to vector<2x32xf32>
    %58 = arith.mulf %55, %42 : vector<2x32xf32>
    %59 = arith.mulf %54, %56 : vector<2x32xf32>
    %60 = arith.addf %58, %59 : vector<2x32xf32>
    %61 = math.tanh %60 : vector<2x32xf32>
    %62 = arith.mulf %57, %61 : vector<2x32xf32>
    %63 = vector.extract_strided_slice %5 {offsets = [6, 0], sizes = [2, 128], strides = [1, 1]} : vector<16x128xf32> to vector<2x128xf32>
    %cst_15 = arith.constant dense<0.000000e+00> : vector<2x128xf32>
    %64 = tpu.matmul %62, %6, %cst_15 {dimension_numbers = #tpu.dot_dimension_numbers<[1], [0], [0], [1], [0, 0, 1, 1], [], []>} : vector<2x32xf32>, vector<32x128xf32>, vector<2x128xf32> -> vector<2x128xf32>
    %65 = arith.addf %63, %64 : vector<2x128xf32>
    %66 = arith.negf %65 : vector<2x128xf32>
    %67 = math.exp %66 : vector<2x128xf32>
    %cst_16 = arith.constant 1.000000e+00 : f32
    %68 = vector.broadcast %cst_16 : f32 to vector<2x128xf32>
    %69 = arith.addf %68, %67 : vector<2x128xf32>
    %70 = arith.divf %68, %69 : vector<2x128xf32>
    %71 = math.tanh %65 : vector<2x128xf32>
    %72 = vector.extract_strided_slice %70 {offsets = [0, 0], sizes = [2, 32], strides = [1, 1]} : vector<2x128xf32> to vector<2x32xf32>
    %73 = vector.extract_strided_slice %70 {offsets = [0, 32], sizes = [2, 32], strides = [1, 1]} : vector<2x128xf32> to vector<2x32xf32>
    %74 = vector.extract_strided_slice %71 {offsets = [0, 64], sizes = [2, 32], strides = [1, 1]} : vector<2x128xf32> to vector<2x32xf32>
    %75 = vector.extract_strided_slice %70 {offsets = [0, 96], sizes = [2, 32], strides = [1, 1]} : vector<2x128xf32> to vector<2x32xf32>
    %76 = arith.mulf %73, %60 : vector<2x32xf32>
    %77 = arith.mulf %72, %74 : vector<2x32xf32>
    %78 = arith.addf %76, %77 : vector<2x32xf32>
    %79 = math.tanh %78 : vector<2x32xf32>
    %80 = arith.mulf %75, %79 : vector<2x32xf32>
    %81 = vector.extract_strided_slice %5 {offsets = [8, 0], sizes = [2, 128], strides = [1, 1]} : vector<16x128xf32> to vector<2x128xf32>
    %cst_17 = arith.constant dense<0.000000e+00> : vector<2x128xf32>
    %82 = tpu.matmul %80, %6, %cst_17 {dimension_numbers = #tpu.dot_dimension_numbers<[1], [0], [0], [1], [0, 0, 1, 1], [], []>} : vector<2x32xf32>, vector<32x128xf32>, vector<2x128xf32> -> vector<2x128xf32>
    %83 = arith.addf %81, %82 : vector<2x128xf32>
    %84 = arith.negf %83 : vector<2x128xf32>
    %85 = math.exp %84 : vector<2x128xf32>
    %cst_18 = arith.constant 1.000000e+00 : f32
    %86 = vector.broadcast %cst_18 : f32 to vector<2x128xf32>
    %87 = arith.addf %86, %85 : vector<2x128xf32>
    %88 = arith.divf %86, %87 : vector<2x128xf32>
    %89 = math.tanh %83 : vector<2x128xf32>
    %90 = vector.extract_strided_slice %88 {offsets = [0, 0], sizes = [2, 32], strides = [1, 1]} : vector<2x128xf32> to vector<2x32xf32>
    %91 = vector.extract_strided_slice %88 {offsets = [0, 32], sizes = [2, 32], strides = [1, 1]} : vector<2x128xf32> to vector<2x32xf32>
    %92 = vector.extract_strided_slice %89 {offsets = [0, 64], sizes = [2, 32], strides = [1, 1]} : vector<2x128xf32> to vector<2x32xf32>
    %93 = vector.extract_strided_slice %88 {offsets = [0, 96], sizes = [2, 32], strides = [1, 1]} : vector<2x128xf32> to vector<2x32xf32>
    %94 = arith.mulf %91, %78 : vector<2x32xf32>
    %95 = arith.mulf %90, %92 : vector<2x32xf32>
    %96 = arith.addf %94, %95 : vector<2x32xf32>
    %97 = math.tanh %96 : vector<2x32xf32>
    %98 = arith.mulf %93, %97 : vector<2x32xf32>
    %99 = vector.extract_strided_slice %5 {offsets = [10, 0], sizes = [2, 128], strides = [1, 1]} : vector<16x128xf32> to vector<2x128xf32>
    %cst_19 = arith.constant dense<0.000000e+00> : vector<2x128xf32>
    %100 = tpu.matmul %98, %6, %cst_19 {dimension_numbers = #tpu.dot_dimension_numbers<[1], [0], [0], [1], [0, 0, 1, 1], [], []>} : vector<2x32xf32>, vector<32x128xf32>, vector<2x128xf32> -> vector<2x128xf32>
    %101 = arith.addf %99, %100 : vector<2x128xf32>
    %102 = arith.negf %101 : vector<2x128xf32>
    %103 = math.exp %102 : vector<2x128xf32>
    %cst_20 = arith.constant 1.000000e+00 : f32
    %104 = vector.broadcast %cst_20 : f32 to vector<2x128xf32>
    %105 = arith.addf %104, %103 : vector<2x128xf32>
    %106 = arith.divf %104, %105 : vector<2x128xf32>
    %107 = math.tanh %101 : vector<2x128xf32>
    %108 = vector.extract_strided_slice %106 {offsets = [0, 0], sizes = [2, 32], strides = [1, 1]} : vector<2x128xf32> to vector<2x32xf32>
    %109 = vector.extract_strided_slice %106 {offsets = [0, 32], sizes = [2, 32], strides = [1, 1]} : vector<2x128xf32> to vector<2x32xf32>
    %110 = vector.extract_strided_slice %107 {offsets = [0, 64], sizes = [2, 32], strides = [1, 1]} : vector<2x128xf32> to vector<2x32xf32>
    %111 = vector.extract_strided_slice %106 {offsets = [0, 96], sizes = [2, 32], strides = [1, 1]} : vector<2x128xf32> to vector<2x32xf32>
    %112 = arith.mulf %109, %96 : vector<2x32xf32>
    %113 = arith.mulf %108, %110 : vector<2x32xf32>
    %114 = arith.addf %112, %113 : vector<2x32xf32>
    %115 = math.tanh %114 : vector<2x32xf32>
    %116 = arith.mulf %111, %115 : vector<2x32xf32>
    %117 = vector.extract_strided_slice %5 {offsets = [12, 0], sizes = [2, 128], strides = [1, 1]} : vector<16x128xf32> to vector<2x128xf32>
    %cst_21 = arith.constant dense<0.000000e+00> : vector<2x128xf32>
    %118 = tpu.matmul %116, %6, %cst_21 {dimension_numbers = #tpu.dot_dimension_numbers<[1], [0], [0], [1], [0, 0, 1, 1], [], []>} : vector<2x32xf32>, vector<32x128xf32>, vector<2x128xf32> -> vector<2x128xf32>
    %119 = arith.addf %117, %118 : vector<2x128xf32>
    %120 = arith.negf %119 : vector<2x128xf32>
    %121 = math.exp %120 : vector<2x128xf32>
    %cst_22 = arith.constant 1.000000e+00 : f32
    %122 = vector.broadcast %cst_22 : f32 to vector<2x128xf32>
    %123 = arith.addf %122, %121 : vector<2x128xf32>
    %124 = arith.divf %122, %123 : vector<2x128xf32>
    %125 = math.tanh %119 : vector<2x128xf32>
    %126 = vector.extract_strided_slice %124 {offsets = [0, 0], sizes = [2, 32], strides = [1, 1]} : vector<2x128xf32> to vector<2x32xf32>
    %127 = vector.extract_strided_slice %124 {offsets = [0, 32], sizes = [2, 32], strides = [1, 1]} : vector<2x128xf32> to vector<2x32xf32>
    %128 = vector.extract_strided_slice %125 {offsets = [0, 64], sizes = [2, 32], strides = [1, 1]} : vector<2x128xf32> to vector<2x32xf32>
    %129 = vector.extract_strided_slice %124 {offsets = [0, 96], sizes = [2, 32], strides = [1, 1]} : vector<2x128xf32> to vector<2x32xf32>
    %130 = arith.mulf %127, %114 : vector<2x32xf32>
    %131 = arith.mulf %126, %128 : vector<2x32xf32>
    %132 = arith.addf %130, %131 : vector<2x32xf32>
    %133 = math.tanh %132 : vector<2x32xf32>
    %134 = arith.mulf %129, %133 : vector<2x32xf32>
    %135 = vector.extract_strided_slice %5 {offsets = [14, 0], sizes = [2, 128], strides = [1, 1]} : vector<16x128xf32> to vector<2x128xf32>
    %cst_23 = arith.constant dense<0.000000e+00> : vector<2x128xf32>
    %136 = tpu.matmul %134, %6, %cst_23 {dimension_numbers = #tpu.dot_dimension_numbers<[1], [0], [0], [1], [0, 0, 1, 1], [], []>} : vector<2x32xf32>, vector<32x128xf32>, vector<2x128xf32> -> vector<2x128xf32>
    %137 = arith.addf %135, %136 : vector<2x128xf32>
    %138 = arith.negf %137 : vector<2x128xf32>
    %139 = math.exp %138 : vector<2x128xf32>
    %cst_24 = arith.constant 1.000000e+00 : f32
    %140 = vector.broadcast %cst_24 : f32 to vector<2x128xf32>
    %141 = arith.addf %140, %139 : vector<2x128xf32>
    %142 = arith.divf %140, %141 : vector<2x128xf32>
    %143 = math.tanh %137 : vector<2x128xf32>
    %144 = vector.extract_strided_slice %142 {offsets = [0, 0], sizes = [2, 32], strides = [1, 1]} : vector<2x128xf32> to vector<2x32xf32>
    %145 = vector.extract_strided_slice %142 {offsets = [0, 32], sizes = [2, 32], strides = [1, 1]} : vector<2x128xf32> to vector<2x32xf32>
    %146 = vector.extract_strided_slice %143 {offsets = [0, 64], sizes = [2, 32], strides = [1, 1]} : vector<2x128xf32> to vector<2x32xf32>
    %147 = vector.extract_strided_slice %142 {offsets = [0, 96], sizes = [2, 32], strides = [1, 1]} : vector<2x128xf32> to vector<2x32xf32>
    %148 = arith.mulf %145, %132 : vector<2x32xf32>
    %149 = arith.mulf %144, %146 : vector<2x32xf32>
    %150 = arith.addf %148, %149 : vector<2x32xf32>
    %151 = math.tanh %150 : vector<2x32xf32>
    %152 = arith.mulf %147, %151 : vector<2x32xf32>
    %153 = tpu.concatenate %26, %44, %62, %80, %98, %116, %134, %152 in 0 : vector<2x32xf32>, vector<2x32xf32>, vector<2x32xf32>, vector<2x32xf32>, vector<2x32xf32>, vector<2x32xf32>, vector<2x32xf32>, vector<2x32xf32> -> vector<16x32xf32>
    %c0_25 = arith.constant 0 : index
    %c0_26 = arith.constant 0 : index
    %154 = vector.load %arg5[%c0_25, %c0_26] : memref<32x128xf32, #tpu.memory_space<vmem>>, vector<32x128xf32>
    %cst_27 = arith.constant dense<0.000000e+00> : vector<16x128xf32>
    %155 = tpu.matmul %153, %154, %cst_27 {dimension_numbers = #tpu.dot_dimension_numbers<[1], [0], [0], [1], [0, 0, 1, 1], [], []>} : vector<16x32xf32>, vector<32x128xf32>, vector<16x128xf32> -> vector<16x128xf32>
    %c0_28 = arith.constant 0 : index
    %c0_29 = arith.constant 0 : index
    %156 = vector.load %arg6[%c0_28, %c0_29] : memref<1x128xf32, #tpu.memory_space<vmem>>, vector<1x128xf32>
    %157 = vector.broadcast %156 : vector<1x128xf32> to vector<16x128xf32>
    %158 = arith.addf %155, %157 : vector<16x128xf32>
    %c0_30 = arith.constant 0 : index
    %c0_31 = arith.constant 0 : index
    %159 = vector.load %arg7[%c0_30, %c0_31] : memref<16x128xf32, #tpu.memory_space<vmem>>, vector<16x128xf32>
    tpu.vector_store %arg7[%c0_30, %c0_31], %158 {strides = array<i32>} : memref<16x128xf32, #tpu.memory_space<vmem>>, vector<16x128xf32>,
    %cst_32 = arith.constant dense<0xFF800000> : vector<16xf32>
    %160 = vector.multi_reduction <maximumf>, %158, %cst_32 [1] : vector<16x128xf32> to vector<16xf32>
    %161 = vector.shape_cast %160 : vector<16xf32> to vector<16x1xf32>
    %162 = vector.broadcast %161 : vector<16x1xf32> to vector<16x128xf32>
    %163 = arith.subf %158, %162 : vector<16x128xf32>
    %164 = math.exp %163 : vector<16x128xf32>
    %cst_33 = arith.constant dense<0.000000e+00> : vector<16xf32>
    %165 = vector.multi_reduction <add>, %164, %cst_33 [1] : vector<16x128xf32> to vector<16xf32>
    %166 = vector.shape_cast %165 : vector<16xf32> to vector<16x1xf32>
    %167 = math.log %166 : vector<16x1xf32>
    %168 = arith.addf %161, %167 : vector<16x1xf32>
    %169 = tpu.iota {dimensions = array<i32: 1>} : vector<16x128xi32>
    %c0_34 = arith.constant 0 : index
    %c0_35 = arith.constant 0 : index
    %170 = vector.load %arg1[%c0_34, %c0_35] : memref<16x1xi32, #tpu.memory_space<vmem>>, vector<16x1xi32>
    %171 = vector.broadcast %170 : vector<16x1xi32> to vector<16x128xi32>
    %172 = arith.cmpi eq, %169, %171 : vector<16x128xi32>
    %cst_36 = arith.constant 0.000000e+00 : f32
    %173 = vector.broadcast %cst_36 : f32 to vector<16x128xf32>
    %174 = arith.select %172, %158, %173 : vector<16x128xi1>, vector<16x128xf32>
    %cst_37 = arith.constant dense<0.000000e+00> : vector<16xf32>
    %175 = vector.multi_reduction <add>, %174, %cst_37 [1] : vector<16x128xf32> to vector<16xf32>
    %176 = vector.shape_cast %175 : vector<16xf32> to vector<16x1xf32>
    %177 = arith.subf %168, %176 : vector<16x1xf32>
    %178 = vector.shape_cast %177 : vector<16x1xf32> to vector<1x16x1xf32>
    %cst_38 = arith.constant dense<0.000000e+00> : vector<1xf32>
    %179 = vector.multi_reduction <add>, %178, %cst_38 [1, 2] : vector<1x16x1xf32> to vector<1xf32>
    %180 = vector.shape_cast %179 : vector<1xf32> to vector<1x1x1xf32>
    %181 = vector.extract %180[0, 0, 0] : f32 from vector<1x1x1xf32>
    %cst_39 = arith.constant 1.600000e+01 : f32
    %182 = arith.divf %181, %cst_39 : f32
    %183 = vector.broadcast %182 : f32 to vector<1x1xf32>
    %c0_40 = arith.constant 0 : index
    %c0_41 = arith.constant 0 : index
    %184 = vector.load %arg8[%c0_40, %c0_41] : memref<1x1xf32, #tpu.memory_space<vmem>>, vector<1x1xf32>
    tpu.vector_store %arg8[%c0_40, %c0_41], %183 {strides = array<i32>} : memref<1x1xf32, #tpu.memory_space<vmem>>, vector<1x1xf32>,
    return
  }
}

</mosaic_0001>

<llo_original>
// kernel: lstm_model_forward.1
$region0: #{lstm_model_forward.1}
  #allocation0 [shape = 'u32[]', space=smem, size = 0x4, offset = 0x4, fixed_abs, tag = 'smem constant byte address 0x4 - core index']
  #allocation1 [shape = 'u32[72,128]{1,0:T(1,128)}', space=vmem, size = 0x9000, scoped, tag = 'internal scratch']
  %s0 = inlined_call_operand.vmem [shape: f32[16,16], index: 0, kind: input, shape index: {}]
  %s1 = inlined_call_operand.vmem [shape: s32[16,1], index: 1, kind: input, shape index: {}]
  %s2 = inlined_call_operand.vmem [shape: f32[16,128], index: 2, kind: input, shape index: {}]
  %s3 = inlined_call_operand.vmem [shape: f32[32,128], index: 3, kind: input, shape index: {}]
  %s4 = inlined_call_operand.vmem [shape: f32[1,128], index: 4, kind: input, shape index: {}]
  %s5 = inlined_call_operand.vmem [shape: f32[32,128], index: 5, kind: input, shape index: {}]
  %s6 = inlined_call_operand.vmem [shape: f32[1,128], index: 6, kind: input, shape index: {}]
  %s7 = inlined_call_operand.vmem [shape: f32[16,128], index: 7, kind: output, shape index: {0}]
  %s8 = inlined_call_operand.hbm [shape: f32[1,1], index: 8, kind: output, shape index: {1}]
  %9 = xla_tuple %s7, %s8
  %s10 = sld [smem:[#allocation0]]
  $region46: #{lstm_model_forward.1} parent=0
    _
  %s12 = ssub.s32 1, %s10
  %s13 = scalar_select 0, %s12, %s10
  $region1: #{lstm_model_forward.1} parent=0
    #allocation2 [shape = 'u8[512]{0}', space=vmem, size = 0x400, scoped, tag = 'output window, operand 1, single buffered']
    #allocation3 [shape = 's32[1]{0}', space=sflag, size = 0x4, scoped, tag = 'scoped memory for lstm_model_forward.1']
    %14 = vsyncpa [#allocation3], 0
    // Predicated region
    $region2: #{lstm_model_forward.1} parent=1 // pred_check
      _
    $region3: #{lstm_model_forward.1} parent=1 // pred_check_branch
      %16 = sbr.rel (0) target = $region5
    $region4: #{lstm_model_forward.1} parent=1 // pred_region
      _
    $region5: #{lstm_model_forward.1} parent=1 // pred_fallthru
      _
    // Predicated region
    $region6: #{lstm_model_forward.1} parent=1 // pred_check
      _
    $region7: #{lstm_model_forward.1} parent=1 // pred_check_branch
      %18 = sbr.rel (0) target = $region9
    $region8: #{lstm_model_forward.1} parent=1 // pred_region
      _
    $region9: #{lstm_model_forward.1} parent=1 // pred_fallthru
      _
    // Predicated region
    $region10: #{lstm_model_forward.1} parent=1 // pred_check
      _
    $region11: #{lstm_model_forward.1} parent=1 // pred_check_branch
      %20 = sbr.rel (0) target = $region13
    $region12: #{lstm_model_forward.1} parent=1 // pred_region
      _
    $region13: #{lstm_model_forward.1} parent=1 // pred_fallthru
      _
    // Predicated region
    $region14: #{lstm_model_forward.1} parent=1 // pred_check
      _
    $region15: #{lstm_model_forward.1} parent=1 // pred_check_branch
      %22 = sbr.rel (0) target = $region17
    $region16: #{lstm_model_forward.1} parent=1 // pred_region
      _
    $region17: #{lstm_model_forward.1} parent=1 // pred_fallthru
      _
    // Predicated region
    $region18: #{lstm_model_forward.1} parent=1 // pred_check
      _
    $region19: #{lstm_model_forward.1} parent=1 // pred_check_branch
      %24 = sbr.rel (0) target = $region21
    $region20: #{lstm_model_forward.1} parent=1 // pred_region
      _
    $region21: #{lstm_model_forward.1} parent=1 // pred_fallthru
      _
    // Predicated region
    $region22: #{lstm_model_forward.1} parent=1 // pred_check
      _
    $region23: #{lstm_model_forward.1} parent=1 // pred_check_branch
      %26 = sbr.rel (0) target = $region25
    $region24: #{lstm_model_forward.1} parent=1 // pred_region
      _
    $region25: #{lstm_model_forward.1} parent=1 // pred_fallthru
      _
    // Predicated region
    $region26: #{lstm_model_forward.1} parent=1 // pred_check
      _
    $region27: #{lstm_model_forward.1} parent=1 // pred_check_branch
      %28 = sbr.rel (0) target = $region29
    $region28: #{lstm_model_forward.1} parent=1 // pred_region
      _
    $region29: #{lstm_model_forward.1} parent=1 // pred_fallthru
      _
    %v29 = vld [vmem:[%s0] sm:$0xff]
    %v30 = vld [vmem:[%s0 + $0x8] sm:$0xff]
    %v31 = vld [vmem:[%s2] sm:$0xff]
    %v32 = vld [vmem:[%s2 + $0x8] sm:$0xff]
    %v33 = vld [vmem:[%s4] sm:$0x1]
    %v35 = vperm.slane %v33, 0
    %vm37 = vcmask 130048
    %v39 = vsel %vm37, %v29, 0
    %v42 = vsel %vm37, %v30, 0
    %44 = vmatpush.msra.mxu0 0.0
    %45 = vmatpush.msra.mxu0 0.0
    %46 = vmatpush.msra.mxu0 0.0
    %47 = vmatpush.msra.mxu0 0.0
    %48 = vmatpush.msra.mxu0 0.0
    %49 = vmatpush.msra.mxu0 0.0
    %50 = vmatpush.msra.mxu0 0.0
    %51 = vmatpush.msra.mxu0 0.0
    %52 = vmatpush.msra.mxu0 0.0
    %53 = vmatpush.msra.mxu0 0.0
    %54 = vmatpush.msra.mxu0 0.0
    %55 = vmatpush.msra.mxu0 0.0
    %56 = vmatpush.msra.mxu0 0.0
    %57 = vmatpush.msra.mxu0 0.0
    %58 = vmatpush.msra.mxu0 %v32
    %59 = vmatpush.msra.mxu0 %v31
    %60 = vmatmul.f32.gmra.mxu0 %v39
    %v61 = vpop.f32.mrf.mxu0
    %v62 = vadd.f32 %v35, %v61
    %63 = vmatmul.f32.gmra.mxu0 %v42
    %v64 = vpop.f32.mrf.mxu0
    %v65 = vadd.f32 %v35, %v64
    %66 = vdwg.mxu0
    %v67 = vld [vmem:[%s3] sm:$0xff]
    %v68 = vld [vmem:[%s3 + $0x8] sm:$0xff]
    %v69 = vld [vmem:[%s3 + $0x10] sm:$0xff]
    %v70 = vld [vmem:[%s3 + $0x18] sm:$0xff]
    %vm71 = vcmask 261120
    %v73 = vsel %vm71, 0.0, 0
    %75 = vmatpush.msra.mxu0 0.0
    %76 = vmatpush.msra.mxu0 0.0
    %77 = vmatpush.msra.mxu0 0.0
    %78 = vmatpush.msra.mxu0 0.0
    %79 = vmatpush.msra.mxu0 0.0
    %80 = vmatpush.msra.mxu0 0.0
    %81 = vmatpush.msra.mxu0 0.0
    %82 = vmatpush.msra.mxu0 0.0
    %83 = vmatpush.msra.mxu0 0.0
    %84 = vmatpush.msra.mxu0 0.0
    %85 = vmatpush.msra.mxu0 0.0
    %86 = vmatpush.msra.mxu0 0.0
    %87 = vmatpush.msra.mxu0 %v70
    %88 = vmatpush.msra.mxu0 %v69
    %89 = vmatpush.msra.mxu0 %v68
    %90 = vmatpush.msra.mxu0 %v67
    %91 = vmatmul.f32.gmra.mxu0 %v73
    %v92 = vpop.f32.mrf.mxu0
    %v93 = vadd.f32 0.0, %v92
    %94 = vdwg.mxu0
    %v95 = vadd.f32 %v62, %v93
    %v96 = vxor.u32 %v95, 2147483648
    %v97 = vmul.f32 %v96, 1.442695
    %v98 = vpow.pop %v97
    %v99 = vadd.f32 %v98, 1.0
    %v100 = vrcp.pop %v99
    %v101 = vmul.f32 %v99, %v100
    %v102 = vsub.f32 1.0, %v101
    %v103 = vmul.f32 %v100, %v102
    %v104 = vadd.f32 %v100, %v103
    %vm105 = vweird.f32 %v99
    %vm106 = vweird.f32 %v100
    %vm107 = vmor %vm105, %vm106
    %v108 = vsel %vm107, %v100, %v104
    %v109 = vand.u32 2147483647, %v99
    %vm110 = vcmp.eq.f32.partialorder %v109, 8.507059e+37
    %v111 = vand.u32 %v99, 2147483648
    %v112 = vor.u32 1.1754944e-38, %v111
    %v113 = vsel %vm110, %v112, %v108
    %v114 = vmul.f32 1.0, %v113
    %v115 = vtanh.pop %v95
    %v116 = vmul.f32 %v114, 0.0
    %118 = vrot.lane.b32.xlu0 %v115, 64
    %v119 = vpop.permute.xlu0 %118
    %v121 = vmul.f32 %v114, %v119
    %123 = vrot.lane.b32.xlu0 %v121, 32
    %v124 = vpop.permute.xlu0 %123
    %v126 = vadd.f32 %v116, %v124
    %v127 = vtanh.pop %v126
    %129 = vrot.lane.b32.xlu0 %v127, 64
    %v130 = vpop.permute.xlu0 %129
    %v132 = vmul.f32 %v114, %v130
    %134 = vrot.lane.b32.xlu0 %v132, 32
    %v135 = vpop.permute.xlu0 %134
    %v136 = vsel %vm71, %v135, 0
    %138 = vmatpush.msra.mxu0 0.0
    %139 = vmatpush.msra.mxu0 0.0
    %140 = vmatpush.msra.mxu0 0.0
    %141 = vmatpush.msra.mxu0 0.0
    %142 = vmatpush.msra.mxu0 0.0
    %143 = vmatpush.msra.mxu0 0.0
    %144 = vmatpush.msra.mxu0 0.0
    %145 = vmatpush.msra.mxu0 0.0
    %146 = vmatpush.msra.mxu0 0.0
    %147 = vmatpush.msra.mxu0 0.0
    %148 = vmatpush.msra.mxu0 0.0
    %149 = vmatpush.msra.mxu0 0.0
    %150 = vmatpush.msra.mxu0 %v70
    %151 = vmatpush.msra.mxu0 %v69
    %152 = vmatpush.msra.mxu0 %v68
    %153 = vmatpush.msra.mxu0 %v67
    %154 = vmatmul.f32.gmra.mxu0 %v136
    %v155 = vpop.f32.mrf.mxu0
    %v156 = vadd.f32 0.0, %v155
    %157 = vdwg.mxu0
    %v159 = vrot.slane %v156, 6
    %v161 = vadd.f32 %v62, %v159
    %v162 = vxor.u32 %v161, 2147483648
    %v163 = vmul.f32 %v162, 1.442695
    %v164 = vpow.pop %v163
    %v165 = vadd.f32 %v164, 1.0
    %v166 = vrcp.pop %v165
    %v167 = vmul.f32 %v165, %v166
    %v168 = vsub.f32 1.0, %v167
    %v169 = vmul.f32 %v166, %v168
    %v170 = vadd.f32 %v166, %v169
    %vm171 = vweird.f32 %v165
    %vm172 = vweird.f32 %v166
    %vm173 = vmor %vm171, %vm172
    %v174 = vsel %vm173, %v166, %v170
    %v175 = vand.u32 2147483647, %v165
    %vm176 = vcmp.eq.f32.partialorder %v175, 8.507059e+37
    %v177 = vand.u32 %v165, 2147483648
    %v178 = vor.u32 1.1754944e-38, %v177
    %v179 = vsel %vm176, %v178, %v174
    %v180 = vmul.f32 1.0, %v179
    %v181 = vtanh.pop %v161
    %v183 = vrot.slane %v126, 6
    %v185 = vmul.f32 %v180, %v183
    %187 = vrot.lane.b32.xlu0 %v181, 64
    %v188 = vpop.permute.xlu0 %187
    %v190 = vmul.f32 %v180, %v188
    %192 = vrot.lane.b32.xlu0 %v190, 32
    %v193 = vpop.permute.xlu0 %192
    %v195 = vadd.f32 %v185, %v193
    %v196 = vtanh.pop %v195
    %198 = vrot.lane.b32.xlu0 %v196, 64
    %v199 = vpop.permute.xlu0 %198
    %v201 = vmul.f32 %v180, %v199
    %v203 = vrot.slane %v201, 2
    %204 = vrot.lane.b32.xlu0 %v203, 32
    %v205 = vpop.permute.xlu0 %204
    %v206 = vsel %vm71, %v205, 0
    %208 = vmatpush.msra.mxu0 0.0
    %209 = vmatpush.msra.mxu0 0.0
    %210 = vmatpush.msra.mxu0 0.0
    %211 = vmatpush.msra.mxu0 0.0
    %212 = vmatpush.msra.mxu0 0.0
    %213 = vmatpush.msra.mxu0 0.0
    %214 = vmatpush.msra.mxu0 0.0
    %215 = vmatpush.msra.mxu0 0.0
    %216 = vmatpush.msra.mxu0 0.0
    %217 = vmatpush.msra.mxu0 0.0
    %218 = vmatpush.msra.mxu0 0.0
    %219 = vmatpush.msra.mxu0 0.0
    %220 = vmatpush.msra.mxu0 %v70
    %221 = vmatpush.msra.mxu0 %v69
    %222 = vmatpush.msra.mxu0 %v68
    %223 = vmatpush.msra.mxu0 %v67
    %224 = vmatmul.f32.gmra.mxu0 %v206
    %v225 = vpop.f32.mrf.mxu0
    %v226 = vadd.f32 0.0, %v225
    %227 = vdwg.mxu0
    %v229 = vrot.slane %v226, 4
    %v231 = vadd.f32 %v62, %v229
    %v232 = vxor.u32 %v231, 2147483648
    %v233 = vmul.f32 %v232, 1.442695
    %v234 = vpow.pop %v233
    %v235 = vadd.f32 %v234, 1.0
    %v236 = vrcp.pop %v235
    %v237 = vmul.f32 %v235, %v236
    %v238 = vsub.f32 1.0, %v237
    %v239 = vmul.f32 %v236, %v238
    %v240 = vadd.f32 %v236, %v239
    %vm241 = vweird.f32 %v235
    %vm242 = vweird.f32 %v236
    %vm243 = vmor %vm241, %vm242
    %v244 = vsel %vm243, %v236, %v240
    %v245 = vand.u32 2147483647, %v235
    %vm246 = vcmp.eq.f32.partialorder %v245, 8.507059e+37
    %v247 = vand.u32 %v235, 2147483648
    %v248 = vor.u32 1.1754944e-38, %v247
    %v249 = vsel %vm246, %v248, %v244
    %v250 = vmul.f32 1.0, %v249
    %v251 = vtanh.pop %v231
    %v253 = vrot.slane %v195, 6
    %v255 = vmul.f32 %v250, %v253
    %257 = vrot.lane.b32.xlu0 %v251, 64
    %v258 = vpop.permute.xlu0 %257
    %v260 = vmul.f32 %v250, %v258
    %262 = vrot.lane.b32.xlu0 %v260, 32
    %v263 = vpop.permute.xlu0 %262
    %v265 = vadd.f32 %v255, %v263
    %v266 = vtanh.pop %v265
    %268 = vrot.lane.b32.xlu0 %v266, 64
    %v269 = vpop.permute.xlu0 %268
    %v271 = vmul.f32 %v250, %v269
    %v273 = vrot.slane %v271, 4
    %274 = vrot.lane.b32.xlu0 %v273, 32
    %v275 = vpop.permute.xlu0 %274
    %v276 = vsel %vm71, %v275, 0
    %278 = vmatpush.msra.mxu0 0.0
    %279 = vmatpush.msra.mxu0 0.0
    %280 = vmatpush.msra.mxu0 0.0
    %281 = vmatpush.msra.mxu0 0.0
    %282 = vmatpush.msra.mxu0 0.0
    %283 = vmatpush.msra.mxu0 0.0
    %284 = vmatpush.msra.mxu0 0.0
    %285 = vmatpush.msra.mxu0 0.0
    %286 = vmatpush.msra.mxu0 0.0
    %287 = vmatpush.msra.mxu0 0.0
    %288 = vmatpush.msra.mxu0 0.0
    %289 = vmatpush.msra.mxu0 0.0
    %290 = vmatpush.msra.mxu0 %v70
    %291 = vmatpush.msra.mxu0 %v69
    %292 = vmatpush.msra.mxu0 %v68
    %293 = vmatpush.msra.mxu0 %v67
    %294 = vmatmul.f32.gmra.mxu0 %v276
    %v295 = vpop.f32.mrf.mxu0
    %v296 = vadd.f32 0.0, %v295
    %297 = vdwg.mxu0
    %v299 = vrot.slane %v296, 2
    %v301 = vadd.f32 %v62, %v299
    %v302 = vxor.u32 %v301, 2147483648
    %v303 = vmul.f32 %v302, 1.442695
    %v304 = vpow.pop %v303
    %v305 = vadd.f32 %v304, 1.0
    %v306 = vrcp.pop %v305
    %v307 = vmul.f32 %v305, %v306
    %v308 = vsub.f32 1.0, %v307
    %v309 = vmul.f32 %v306, %v308
    %v310 = vadd.f32 %v306, %v309
    %vm311 = vweird.f32 %v305
    %vm312 = vweird.f32 %v306
    %vm313 = vmor %vm311, %vm312
    %v314 = vsel %vm313, %v306, %v310
    %v315 = vand.u32 2147483647, %v305
    %vm316 = vcmp.eq.f32.partialorder %v315, 8.507059e+37
    %v317 = vand.u32 %v305, 2147483648
    %v318 = vor.u32 1.1754944e-38, %v317
    %v319 = vsel %vm316, %v318, %v314
    %v320 = vmul.f32 1.0, %v319
    %v321 = vtanh.pop %v301
    %v323 = vrot.slane %v265, 6
    %v325 = vmul.f32 %v320, %v323
    %327 = vrot.lane.b32.xlu0 %v321, 64
    %v328 = vpop.permute.xlu0 %327
    %v330 = vmul.f32 %v320, %v328
    %332 = vrot.lane.b32.xlu0 %v330, 32
    %v333 = vpop.permute.xlu0 %332
    %v335 = vadd.f32 %v325, %v333
    %v336 = vtanh.pop %v335
    %338 = vrot.lane.b32.xlu0 %v336, 64
    %v339 = vpop.permute.xlu0 %338
    %v341 = vmul.f32 %v320, %v339
    %v343 = vrot.slane %v341, 6
    %344 = vrot.lane.b32.xlu0 %v343, 32
    %v345 = vpop.permute.xlu0 %344
    %v346 = vsel %vm71, %v345, 0
    %348 = vmatpush.msra.mxu0 0.0
    %349 = vmatpush.msra.mxu0 0.0
    %350 = vmatpush.msra.mxu0 0.0
    %351 = vmatpush.msra.mxu0 0.0
    %352 = vmatpush.msra.mxu0 0.0
    %353 = vmatpush.msra.mxu0 0.0
    %354 = vmatpush.msra.mxu0 0.0
    %355 = vmatpush.msra.mxu0 0.0
    %356 = vmatpush.msra.mxu0 0.0
    %357 = vmatpush.msra.mxu0 0.0
    %358 = vmatpush.msra.mxu0 0.0
    %359 = vmatpush.msra.mxu0 0.0
    %360 = vmatpush.msra.mxu0 %v70
    %361 = vmatpush.msra.mxu0 %v69
    %362 = vmatpush.msra.mxu0 %v68
    %363 = vmatpush.msra.mxu0 %v67
    %364 = vmatmul.f32.gmra.mxu0 %v346
    %v365 = vpop.f32.mrf.mxu0
    %v366 = vadd.f32 0.0, %v365
    %367 = vdwg.mxu0
    %v368 = vadd.f32 %v65, %v366
    %v369 = vxor.u32 %v368, 2147483648
    %v370 = vmul.f32 %v369, 1.442695
    %v371 = vpow.pop %v370
    %v372 = vadd.f32 %v371, 1.0
    %v373 = vrcp.pop %v372
    %v374 = vmul.f32 %v372, %v373
    %v375 = vsub.f32 1.0, %v374
    %v376 = vmul.f32 %v373, %v375
    %v377 = vadd.f32 %v373, %v376
    %vm378 = vweird.f32 %v372
    %vm379 = vweird.f32 %v373
    %vm380 = vmor %vm378, %vm379
    %v381 = vsel %vm380, %v373, %v377
    %v382 = vand.u32 2147483647, %v372
    %vm383 = vcmp.eq.f32.partialorder %v382, 8.507059e+37
    %v384 = vand.u32 %v372, 2147483648
    %v385 = vor.u32 1.1754944e-38, %v384
    %v386 = vsel %vm383, %v385, %v381
    %v387 = vmul.f32 1.0, %v386
    %v388 = vtanh.pop %v368
    %v390 = vrot.slane %v335, 6
    %v392 = vmul.f32 %v387, %v390
    %394 = vrot.lane.b32.xlu0 %v388, 64
    %v395 = vpop.permute.xlu0 %394
    %v397 = vmul.f32 %v387, %v395
    %399 = vrot.lane.b32.xlu0 %v397, 32
    %v400 = vpop.permute.xlu0 %399
    %v402 = vadd.f32 %v392, %v400
    %v403 = vtanh.pop %v402
    %405 = vrot.lane.b32.xlu0 %v403, 64
    %v406 = vpop.permute.xlu0 %405
    %v408 = vmul.f32 %v387, %v406
    %410 = vrot.lane.b32.xlu0 %v408, 32
    %v411 = vpop.permute.xlu0 %410
    %v412 = vsel %vm71, %v411, 0
    %414 = vmatpush.msra.mxu0 0.0
    %415 = vmatpush.msra.mxu0 0.0
    %416 = vmatpush.msra.mxu0 0.0
    %417 = vmatpush.msra.mxu0 0.0
    %418 = vmatpush.msra.mxu0 0.0
    %419 = vmatpush.msra.mxu0 0.0
    %420 = vmatpush.msra.mxu0 0.0
    %421 = vmatpush.msra.mxu0 0.0
    %422 = vmatpush.msra.mxu0 0.0
    %423 = vmatpush.msra.mxu0 0.0
    %424 = vmatpush.msra.mxu0 0.0
    %425 = vmatpush.msra.mxu0 0.0
    %426 = vmatpush.msra.mxu0 %v70
    %427 = vmatpush.msra.mxu0 %v69
    %428 = vmatpush.msra.mxu0 %v68
    %429 = vmatpush.msra.mxu0 %v67
    %430 = vmatmul.f32.gmra.mxu0 %v412
    %v431 = vpop.f32.mrf.mxu0
    %v432 = vadd.f32 0.0, %v431
    %433 = vdwg.mxu0
    %v435 = vrot.slane %v432, 6
    %v437 = vadd.f32 %v65, %v435
    %v438 = vxor.u32 %v437, 2147483648
    %v439 = vmul.f32 %v438, 1.442695
    %v440 = vpow.pop %v439
    %v441 = vadd.f32 %v440, 1.0
    %v442 = vrcp.pop %v441
    %v443 = vmul.f32 %v441, %v442
    %v444 = vsub.f32 1.0, %v443
    %v445 = vmul.f32 %v442, %v444
    %v446 = vadd.f32 %v442, %v445
    %vm447 = vweird.f32 %v441
    %vm448 = vweird.f32 %v442
    %vm449 = vmor %vm447, %vm448
    %v450 = vsel %vm449, %v442, %v446
    %v451 = vand.u32 2147483647, %v441
    %vm452 = vcmp.eq.f32.partialorder %v451, 8.507059e+37
    %v453 = vand.u32 %v441, 2147483648
    %v454 = vor.u32 1.1754944e-38, %v453
    %v455 = vsel %vm452, %v454, %v450
    %v456 = vmul.f32 1.0, %v455
    %v457 = vtanh.pop %v437
    %v459 = vrot.slane %v402, 6
    %v461 = vmul.f32 %v456, %v459
    %463 = vrot.lane.b32.xlu0 %v457, 64
    %v464 = vpop.permute.xlu0 %463
    %v466 = vmul.f32 %v456, %v464
    %468 = vrot.lane.b32.xlu0 %v466, 32
    %v469 = vpop.permute.xlu0 %468
    %v471 = vadd.f32 %v461, %v469
    %v472 = vtanh.pop %v471
    %474 = vrot.lane.b32.xlu0 %v472, 64
    %v475 = vpop.permute.xlu0 %474
    %v477 = vmul.f32 %v456, %v475
    %v479 = vrot.slane %v477, 2
    %480 = vrot.lane.b32.xlu0 %v479, 32
    %v481 = vpop.permute.xlu0 %480
    %v482 = vsel %vm71, %v481, 0
    %484 = vmatpush.msra.mxu0 0.0
    %485 = vmatpush.msra.mxu0 0.0
    %486 = vmatpush.msra.mxu0 0.0
    %487 = vmatpush.msra.mxu0 0.0
    %488 = vmatpush.msra.mxu0 0.0
    %489 = vmatpush.msra.mxu0 0.0
    %490 = vmatpush.msra.mxu0 0.0
    %491 = vmatpush.msra.mxu0 0.0
    %492 = vmatpush.msra.mxu0 0.0
    %493 = vmatpush.msra.mxu0 0.0
    %494 = vmatpush.msra.mxu0 0.0
    %495 = vmatpush.msra.mxu0 0.0
    %496 = vmatpush.msra.mxu0 %v70
    %497 = vmatpush.msra.mxu0 %v69
    %498 = vmatpush.msra.mxu0 %v68
    %499 = vmatpush.msra.mxu0 %v67
    %500 = vmatmul.f32.gmra.mxu0 %v482
    %v501 = vpop.f32.mrf.mxu0
    %v502 = vadd.f32 0.0, %v501
    %503 = vdwg.mxu0
    %v505 = vrot.slane %v502, 4
    %v507 = vadd.f32 %v65, %v505
    %v508 = vxor.u32 %v507, 2147483648
    %v509 = vmul.f32 %v508, 1.442695
    %v510 = vpow.pop %v509
    %v511 = vadd.f32 %v510, 1.0
    %v512 = vrcp.pop %v511
    %v513 = vmul.f32 %v511, %v512
    %v514 = vsub.f32 1.0, %v513
    %v515 = vmul.f32 %v512, %v514
    %v516 = vadd.f32 %v512, %v515
    %vm517 = vweird.f32 %v511
    %vm518 = vweird.f32 %v512
    %vm519 = vmor %vm517, %vm518
    %v520 = vsel %vm519, %v512, %v516
    %v521 = vand.u32 2147483647, %v511
    %vm522 = vcmp.eq.f32.partialorder %v521, 8.507059e+37
    %v523 = vand.u32 %v511, 2147483648
    %v524 = vor.u32 1.1754944e-38, %v523
    %v525 = vsel %vm522, %v524, %v520
    %v526 = vmul.f32 1.0, %v525
    %v527 = vtanh.pop %v507
    %v529 = vrot.slane %v471, 6
    %v531 = vmul.f32 %v526, %v529
    %533 = vrot.lane.b32.xlu0 %v527, 64
    %v534 = vpop.permute.xlu0 %533
    %v536 = vmul.f32 %v526, %v534
    %538 = vrot.lane.b32.xlu0 %v536, 32
    %v539 = vpop.permute.xlu0 %538
    %v541 = vadd.f32 %v531, %v539
    %v542 = vtanh.pop %v541
    %544 = vrot.lane.b32.xlu0 %v542, 64
    %v545 = vpop.permute.xlu0 %544
    %v547 = vmul.f32 %v526, %v545
    %v549 = vrot.slane %v547, 4
    %550 = vrot.lane.b32.xlu0 %v549, 32
    %v551 = vpop.permute.xlu0 %550
    %v552 = vsel %vm71, %v551, 0
    %554 = vmatpush.msra.mxu0 0.0
    %555 = vmatpush.msra.mxu0 0.0
    %556 = vmatpush.msra.mxu0 0.0
    %557 = vmatpush.msra.mxu0 0.0
    %558 = vmatpush.msra.mxu0 0.0
    %559 = vmatpush.msra.mxu0 0.0
    %560 = vmatpush.msra.mxu0 0.0
    %561 = vmatpush.msra.mxu0 0.0
    %562 = vmatpush.msra.mxu0 0.0
    %563 = vmatpush.msra.mxu0 0.0
    %564 = vmatpush.msra.mxu0 0.0
    %565 = vmatpush.msra.mxu0 0.0
    %566 = vmatpush.msra.mxu0 %v70
    %567 = vmatpush.msra.mxu0 %v69
    %568 = vmatpush.msra.mxu0 %v68
    %569 = vmatpush.msra.mxu0 %v67
    %570 = vmatmul.f32.gmra.mxu0 %v552
    %v571 = vpop.f32.mrf.mxu0
    %v572 = vadd.f32 0.0, %v571
    %573 = vdwg.mxu0
    %v575 = vrot.slane %v572, 2
    %v577 = vadd.f32 %v65, %v575
    %v578 = vxor.u32 %v577, 2147483648
    %v579 = vmul.f32 %v578, 1.442695
    %v580 = vpow.pop %v579
    %v581 = vadd.f32 %v580, 1.0
    %v582 = vrcp.pop %v581
    %v583 = vmul.f32 %v581, %v582
    %v584 = vsub.f32 1.0, %v583
    %v585 = vmul.f32 %v582, %v584
    %v586 = vadd.f32 %v582, %v585
    %vm587 = vweird.f32 %v581
    %vm588 = vweird.f32 %v582
    %vm589 = vmor %vm587, %vm588
    %v590 = vsel %vm589, %v582, %v586
    %v591 = vand.u32 2147483647, %v581
    %vm592 = vcmp.eq.f32.partialorder %v591, 8.507059e+37
    %v593 = vand.u32 %v581, 2147483648
    %v594 = vor.u32 1.1754944e-38, %v593
    %v595 = vsel %vm592, %v594, %v590
    %v596 = vmul.f32 1.0, %v595
    %v597 = vtanh.pop %v577
    %v599 = vrot.slane %v541, 6
    %v601 = vmul.f32 %v596, %v599
    %603 = vrot.lane.b32.xlu0 %v597, 64
    %v604 = vpop.permute.xlu0 %603
    %v606 = vmul.f32 %v596, %v604
    %608 = vrot.lane.b32.xlu0 %v606, 32
    %v609 = vpop.permute.xlu0 %608
    %v611 = vadd.f32 %v601, %v609
    %v612 = vtanh.pop %v611
    %614 = vrot.lane.b32.xlu0 %v612, 64
    %v615 = vpop.permute.xlu0 %614
    %v617 = vmul.f32 %v596, %v615
    %vm618 = vcmask 1041408
    %v619 = vsel %vm618, %v132, %v201
    %vm620 = vcmask 1043456
    %v621 = vsel %vm620, %v619, %v271
    %vm622 = vcmask 1045504
    %v623 = vsel %vm622, %v621, %v341
    %v624 = vsel %vm618, %v408, %v477
    %v625 = vsel %vm620, %v624, %v547
    %v626 = vsel %vm622, %v625, %v617
    %v627 = vld [vmem:[%s5] sm:$0xff]
    %v628 = vld [vmem:[%s5 + $0x8] sm:$0xff]
    %v629 = vld [vmem:[%s5 + $0x10] sm:$0xff]
    %v630 = vld [vmem:[%s5 + $0x18] sm:$0xff]
    %v631 = vld [vmem:[%s6] sm:$0x1]
    %v633 = vperm.slane %v631, 0
    %637 = vrot.lane.b32.xlu0 %v623, 32
    %v638 = vpop.permute.xlu0 %637
    %639 = vrot.lane.b32.xlu0 %v626, 32
    %v640 = vpop.permute.xlu0 %639
    %v641 = vsel %vm71, %v638, 0
    %v643 = vsel %vm71, %v640, 0
    %645 = vmatpush.msra.mxu0 0.0
    %646 = vmatpush.msra.mxu0 0.0
    %647 = vmatpush.msra.mxu0 0.0
    %648 = vmatpush.msra.mxu0 0.0
    %649 = vmatpush.msra.mxu0 0.0
    %650 = vmatpush.msra.mxu0 0.0
    %651 = vmatpush.msra.mxu0 0.0
    %652 = vmatpush.msra.mxu0 0.0
    %653 = vmatpush.msra.mxu0 0.0
    %654 = vmatpush.msra.mxu0 0.0
    %655 = vmatpush.msra.mxu0 0.0
    %656 = vmatpush.msra.mxu0 0.0
    %657 = vmatpush.msra.mxu0 %v630
    %658 = vmatpush.msra.mxu0 %v629
    %659 = vmatpush.msra.mxu0 %v628
    %660 = vmatpush.msra.mxu0 %v627
    %661 = vmatmul.f32.gmra.mxu0 %v641
    %v662 = vpop.f32.mrf.mxu0
    %v663 = vadd.f32 %v633, %v662
    %664 = vmatmul.f32.gmra.mxu0 %v643
    %v665 = vpop.f32.mrf.mxu0
    %v666 = vadd.f32 %v633, %v665
    %667 = vdwg.mxu0
    %668 = vst [vmem:[%s7] sm:$0xff] %v663
    %669 = vst [vmem:[%s7 + $0x8] sm:$0xff] %v666
    %670 = vmax.xlane.f32.xlu0 %v663
    %v671 = vpop.xlane.xlu0 %670
    %672 = vmax.xlane.f32.xlu0 %v666
    %v673 = vpop.xlane.xlu0 %672
    %v674 = vsub.f32 %v663, %v671
    %v675 = vsub.f32 %v666, %v673
    %v676 = vmul.f32 %v674, 1.442695
    %v677 = vpow.pop %v676
    %v678 = vmul.f32 %v675, 1.442695
    %v679 = vpow.pop %v678
    %680 = vadd.xlane.f32.xlu0 %v677
    %v681 = vpop.xlane.xlu0 %680
    %682 = vadd.xlane.f32.xlu0 %v679
    %v683 = vpop.xlane.xlu0 %682
    %v684 = vlog2.pop %v681
    %v685 = vmul.f32 %v684, 0.6931472
    %v686 = vlog2.pop %v683
    %v687 = vmul.f32 %v686, 0.6931472
    %v688 = vadd.f32 %v671, %v685
    %v689 = vadd.f32 %v673, %v687
    %v690 = vlaneseq
    %v691 = vand.u32 %v690, 127
    %v692 = vld [vmem:[%s1] sm:$0xff]
    %v693 = vld [vmem:[%s1 + $0x8] sm:$0xff]
    %694 = vset.pattern.permute.xlu0 0
    %695 = vperm.xlu0 %694, %v692
    %v696 = vpop.permute.xlu0 %695
    %697 = vset.pattern.permute.xlu0 0
    %698 = vperm.xlu0 %697, %v693
    %v699 = vpop.permute.xlu0 %698
    %vm700 = vcmp.eq.s32.totalorder %v691, %v696
    %vm701 = vcmp.eq.s32.totalorder %v691, %v699
    %v702 = vsel %vm700, %v663, 0.0
    %v703 = vsel %vm701, %v666, 0.0
    %704 = vadd.xlane.f32.xlu0 %v702
    %v705 = vpop.xlane.xlu0 %704
    %706 = vadd.xlane.f32.xlu0 %v703
    %v707 = vpop.xlane.xlu0 %706
    %v708 = vsub.f32 %v688, %v705
    %v709 = vsub.f32 %v689, %v707
    %vm710 = vcmask 7168
    %v711 = vsel %vm710, %v708, 0.0
    %v712 = vsel %vm710, %v709, 0.0
    %v713 = vadd.f32 %v711, %v712
    %714 = vadd.xlane.f32.xlu0 %v713
    %v715 = vpop.xlane.xlu0 %714
    %v716 = vrot.slane %v715, 4
    %v717 = vadd.f32 %v715, %v716
    %v718 = vrot.slane %v717, 2
    %v719 = vadd.f32 %v717, %v718
    %v720 = vrot.slane %v719, 1
    %v721 = vadd.f32 %v719, %v720
    %s722 = vtos %v721
    %v723 = vrcp.pop 16.0
    %v724 = vmul.f32 16.0, %v723
    %v725 = vsub.f32 1.0, %v724
    %v726 = vmul.f32 %v723, %v725
    %v727 = vadd.f32 %v723, %v726
    %vm728 = vweird.f32 %v723
    %v729 = vsel %vm728, %v723, %v727
    %s730 = vtos %v729
    %s731 = smul.f32 %s722, %s730
    %v732 = vstv %s731
    %vm733 = vcmask 0
    %734 = vst.msk [vmem:[#allocation2] sm:$0x1] %vm733, %v732
    // Predicated region
    $region30: #{lstm_model_forward.1} parent=1 // pred_check
      _
    $region31: #{lstm_model_forward.1} parent=1 // pred_check_branch
      %736 = sbr.rel (0) target = $region33
    $region32: #{lstm_model_forward.1} parent=1 // pred_region
      _
    $region33: #{lstm_model_forward.1} parent=1 // pred_fallthru
      _
    // Predicated region
    $region34: #{lstm_model_forward.1} parent=1 // pred_check
      _
    $region35: #{lstm_model_forward.1} parent=1 // pred_check_branch
      %738 = sbr.rel (0) target = $region37
    $region36: #{lstm_model_forward.1} parent=1 // pred_region
      %740 = vsyncadd [#allocation3], 0
      %s742 = sshll.u32 [#allocation2], 4
      %s743 = int_to_ptr.vmem [resolvable:$true] %s742
      %s744 = sshll.u32 %s8, 4
      %s745 = int_to_ptr.hbm [resolvable:$true] %s744
      %747 = dma.vmem_to_hbm [thread:$0]  %s743, 16, %s745, [#allocation3]
    $region37: #{lstm_model_forward.1} parent=1 // pred_fallthru
      _
    // Predicated region
    $region38: #{lstm_model_forward.1} parent=1 // pred_check
      _
    $region39: #{lstm_model_forward.1} parent=1 // pred_check_branch
      %749 = sbr.rel (0) target = $region41
    $region40: #{lstm_model_forward.1} parent=1 // pred_region
      _
    $region41: #{lstm_model_forward.1} parent=1 // pred_fallthru
      _
    // Predicated region
    $region42: #{lstm_model_forward.1} parent=1 // pred_check
      _
    $region43: #{lstm_model_forward.1} parent=1 // pred_check_branch
      %751 = sbr.rel (0) target = $region45
    $region44: #{lstm_model_forward.1} parent=1 // pred_region
      %753 = dma.done [#allocation3], 16
    $region45: #{lstm_model_forward.1} parent=1 // pred_fallthru
      _
    %754 = vsyncpa [#allocation3], 1

</llo_original>
